<compile_context>
chip_gen: v7x
topology: tpu7x:2x2x1
jax: 0.10.0
libtpu: 0.0.40
codegen_flags: <defaults>
</compile_context>

<pallas_src>
import jax
import jax.numpy as jnp
from jax.experimental import pallas as pl
from jax.experimental.pallas import tpu as pltpu

_LANE = 128
_SUBLANE = 8
_H1, _H2, _H3 = 64, 64, 32


def _round_up(x, m):
    return ((x + m - 1) // m) * m


def _sigmoid(z):
    # exp goes to the EUP; explicit formula keeps kernel & reference bit-close.
    return 1.0 / (1.0 + jnp.exp(-z))


def _mlp_kernel(x_ref,
                w1_ref, b1_ref,
                w2_ref, b2_ref,
                w3_ref, b3_ref,
                w4_ref, b4_ref,
                o_ref,
                h1_scr, h2_scr, h3_scr):
    """One batch tile: four MXU matmuls + sigmoids, activations staged in VMEM."""
    x = x_ref[...].astype(jnp.float32)

    h1_scr[...] = _sigmoid(
        jnp.dot(x, w1_ref[...], preferred_element_type=jnp.float32) + b1_ref[...])
    h2_scr[...] = _sigmoid(
        jnp.dot(h1_scr[...], w2_ref[...], preferred_element_type=jnp.float32) + b2_ref[...])
    h3_scr[...] = _sigmoid(
        jnp.dot(h2_scr[...], w3_ref[...], preferred_element_type=jnp.float32) + b3_ref[...])
    o_ref[...] = _sigmoid(
        jnp.dot(h3_scr[...], w4_ref[...], preferred_element_type=jnp.float32) + b4_ref[...]
    ).astype(o_ref.dtype)


def mlp_forward(state, params, *, block_b=None):
    """state: (batch, input_dims) f32. params: w1..w4 (in,out), b1..b4 (1,out)."""
    batch, input_dims = state.shape
    out_dims = params["w4"].shape[1]

    # Lane-dense output width (multiple of 128); padded columns sliced off below.
    out_pad = _round_up(max(out_dims, _LANE), _LANE)

    # Batch tile: >= 8 (sublane), capped at 512 for vreg/VMEM predictability.
    if block_b is None:
        block_b = min(512, _round_up(batch, _SUBLANE))
    tile_b = max(_SUBLANE, _round_up(block_b, _SUBLANE))

    batch_pad = _round_up(batch, tile_b)
    x = state.astype(jnp.float32)
    if batch_pad != batch:
        x = jnp.pad(x, ((0, batch_pad - batch), (0, 0)))

    # Zero-pad fc4 weight/bias columns so the kernel's output store is lane-dense.
    w4 = params["w4"].astype(jnp.float32)
    b4 = params["b4"].astype(jnp.float32)
    w4p = jnp.zeros((w4.shape[0], out_pad), jnp.float32).at[:, :out_dims].set(w4)
    b4p = jnp.zeros((1, out_pad), jnp.float32).at[:, :out_dims].set(b4)

    operands = (
        x,
        params["w1"], params["b1"],
        params["w2"], params["b2"],
        params["w3"], params["b3"],
        w4p, b4p,
    )

    grid = (batch_pad // tile_b,)

    def const_spec(a):
        # Full array, same block every grid step -> stays resident in VMEM.
        return pl.BlockSpec(a.shape, lambda i, _nd=a.ndim: (0,) * _nd)

    in_specs = [
        pl.BlockSpec((tile_b, input_dims), lambda i: (i, 0)),  # x: tiled on batch
        const_spec(operands[1]), const_spec(operands[2]),
        const_spec(operands[3]), const_spec(operands[4]),
        const_spec(operands[5]), const_spec(operands[6]),
        const_spec(operands[7]), const_spec(operands[8]),
    ]
    out_spec = pl.BlockSpec((tile_b, out_pad), lambda i: (i, 0))

    flops = 2 * batch_pad * (input_dims * _H1 + _H1 * _H2 + _H2 * _H3 + _H3 * out_pad)
    transcendentals = batch_pad * (_H1 + _H2 + _H3 + out_pad)
    bytes_accessed = 4 * (x.size + sum(int(o.size) for o in operands[1:])
                          + batch_pad * out_pad)

    out_full = pl.pallas_call(
        _mlp_kernel,
        out_shape=jax.ShapeDtypeStruct((batch_pad, out_pad), jnp.float32),
        grid=grid,
        in_specs=in_specs,
        out_specs=out_spec,
        scratch_shapes=[
            pltpu.VMEM((tile_b, _H1), jnp.float32),
            pltpu.VMEM((tile_b, _H2), jnp.float32),
            pltpu.VMEM((tile_b, _H3), jnp.float32),
        ],
        compiler_params=pltpu.CompilerParams(
            dimension_semantics=("parallel",),
        ),
        cost_estimate=pl.CostEstimate(
            flops=flops,
            transcendentals=transcendentals,
            bytes_accessed=bytes_accessed,
        ),
    )(*operands)

    return out_full[:batch, :out_dims]


def init_params(key, input_dims, output_dims):
    """Mirror the PyTorch module's init; weights stored as (in, out)."""
    ks = jax.random.split(key, 8)
    p = {}
    p["w1"] = 0.1 * jax.random.normal(ks[0], (input_dims, _H1), jnp.float32)
    p["b1"] = 0.1 * jax.random.normal(ks[1], (1, _H1), jnp.float32)
    p["w2"] = 0.1 * jax.random.normal(ks[2], (_H1, _H2), jnp.float32)
    p["b2"] = 0.1 * jax.random.normal(ks[3], (1, _H2), jnp.float32)
    p["w3"] = 0.01 * jax.random.normal(ks[4], (_H2, _H3), jnp.float32)
    p["b3"] = 0.01 * jax.random.normal(ks[5], (1, _H3), jnp.float32)
    bound4 = 1.0 / jnp.sqrt(jnp.float32(_H3))
    p["w4"] = jax.random.uniform(ks[6], (_H3, output_dims), jnp.float32,
                                 minval=-bound4, maxval=bound4)
    p["b4"] = jax.random.uniform(ks[7], (1, output_dims), jnp.float32,
                                 minval=-bound4, maxval=bound4)
    return p


def reference_forward(state, p):
    h = _sigmoid(state @ p["w1"] + p["b1"])
    h = _sigmoid(h @ p["w2"] + p["b2"])
    h = _sigmoid(h @ p["w3"] + p["b3"])
    return _sigmoid(h @ p["w4"] + p["b4"])


if __name__ == "__main__":
    input_dims = 16
    output_dims = 4
    batch = 64          # small demo; tile of 16 exercises a 4-step grid pipeline
    block_b = 16

    key = jax.random.PRNGKey(0)
    k_params, k_x = jax.random.split(key)
    params = init_params(k_params, input_dims, output_dims)
    state = jax.random.normal(k_x, (batch, input_dims), jnp.float32)

    out = mlp_forward(state, params, block_b=block_b)
    out = jax.block_until_ready(out)

    ref = reference_forward(state, params)
    assert out.shape == (batch, output_dims), out.shape
    assert jnp.allclose(out, ref, atol=1e-5, rtol=1e-5), "mismatch vs JAX reference"

    print("KERNEL_OK")
</pallas_src>

<mosaic_0001>
module attributes {stable_mosaic.version = 11 : i64} {
  func.func @_mlp_kernel(%arg0: i32, %arg1: memref<16x16xf32, #tpu.memory_space<vmem>>, %arg2: memref<16x64xf32, #tpu.memory_space<vmem>>, %arg3: memref<1x64xf32, #tpu.memory_space<vmem>>, %arg4: memref<64x64xf32, #tpu.memory_space<vmem>>, %arg5: memref<1x64xf32, #tpu.memory_space<vmem>>, %arg6: memref<64x32xf32, #tpu.memory_space<vmem>>, %arg7: memref<1x32xf32, #tpu.memory_space<vmem>>, %arg8: memref<32x128xf32, #tpu.memory_space<vmem>>, %arg9: memref<1x128xf32, #tpu.memory_space<vmem>>, %arg10: memref<16x128xf32, #tpu.memory_space<vmem>>, %arg11: memref<16x64xf32, #tpu.memory_space<vmem>>, %arg12: memref<16x64xf32, #tpu.memory_space<vmem>>, %arg13: memref<16x32xf32, #tpu.memory_space<vmem>>) attributes {dimension_semantics = [#tpu.dimension_semantics<parallel>], iteration_bounds = array<i64: 4>, scalar_prefetch = 0 : i64, scratch_operands = 3 : i64, tpu.core_type = #tpu.core_type<tc>, window_params = [{transform_indices = @transform_0, window_bounds = array<i64: 16, 16>}, {pipeline_mode = #tpu.pipeline_mode<synchronous>, transform_indices = @transform_1, window_bounds = array<i64: 16, 64>}, {pipeline_mode = #tpu.pipeline_mode<synchronous>, transform_indices = @transform_2, window_bounds = array<i64: 1, 64>}, {pipeline_mode = #tpu.pipeline_mode<synchronous>, transform_indices = @transform_3, window_bounds = array<i64: 64, 64>}, {pipeline_mode = #tpu.pipeline_mode<synchronous>, transform_indices = @transform_4, window_bounds = array<i64: 1, 64>}, {pipeline_mode = #tpu.pipeline_mode<synchronous>, transform_indices = @transform_5, window_bounds = array<i64: 64, 32>}, {pipeline_mode = #tpu.pipeline_mode<synchronous>, transform_indices = @transform_6, window_bounds = array<i64: 1, 32>}, {pipeline_mode = #tpu.pipeline_mode<synchronous>, transform_indices = @transform_7, window_bounds = array<i64: 32, 128>}, {pipeline_mode = #tpu.pipeline_mode<synchronous>, transform_indices = @transform_8, window_bounds = array<i64: 1, 128>}, {transform_indices = @transform_9, window_bounds = array<i64: 16, 128>}]} {
    %c0 = arith.constant 0 : index
    %c0_0 = arith.constant 0 : index
    %0 = vector.load %arg1[%c0, %c0_0] : memref<16x16xf32, #tpu.memory_space<vmem>>, vector<16x16xf32>
    %c0_1 = arith.constant 0 : index
    %c0_2 = arith.constant 0 : index
    %1 = vector.load %arg2[%c0_1, %c0_2] : memref<16x64xf32, #tpu.memory_space<vmem>>, vector<16x64xf32>
    %cst = arith.constant dense<0.000000e+00> : vector<16x64xf32>
    %2 = tpu.matmul %0, %1, %cst {dimension_numbers = #tpu.dot_dimension_numbers<[1], [0], [0], [1], [0, 0, 1, 1], [], []>} : vector<16x16xf32>, vector<16x64xf32>, vector<16x64xf32> -> vector<16x64xf32>
    %c0_3 = arith.constant 0 : index
    %c0_4 = arith.constant 0 : index
    %3 = vector.load %arg3[%c0_3, %c0_4] : memref<1x64xf32, #tpu.memory_space<vmem>>, vector<1x64xf32>
    %4 = vector.broadcast %3 : vector<1x64xf32> to vector<16x64xf32>
    %5 = arith.addf %2, %4 : vector<16x64xf32>
    %cst_5 = arith.constant 0.000000e+00 : f32
    %6 = vector.broadcast %cst_5 : f32 to vector<16x64xf32>
    %7 = arith.subf %6, %5 : vector<16x64xf32>
    %8 = math.exp %7 : vector<16x64xf32>
    %cst_6 = arith.constant 1.000000e+00 : f32
    %9 = vector.broadcast %cst_6 : f32 to vector<16x64xf32>
    %10 = arith.addf %9, %8 : vector<16x64xf32>
    %cst_7 = arith.constant 1.000000e+00 : f32
    %11 = vector.broadcast %cst_7 : f32 to vector<16x64xf32>
    %12 = arith.divf %11, %10 : vector<16x64xf32>
    %c0_8 = arith.constant 0 : index
    %c0_9 = arith.constant 0 : index
    %13 = vector.load %arg11[%c0_8, %c0_9] : memref<16x64xf32, #tpu.memory_space<vmem>>, vector<16x64xf32>
    tpu.vector_store %arg11[%c0_8, %c0_9], %12 {strides = array<i32>} : memref<16x64xf32, #tpu.memory_space<vmem>>, vector<16x64xf32>,
    %c0_10 = arith.constant 0 : index
    %c0_11 = arith.constant 0 : index
    %14 = vector.load %arg11[%c0_10, %c0_11] : memref<16x64xf32, #tpu.memory_space<vmem>>, vector<16x64xf32>
    %c0_12 = arith.constant 0 : index
    %c0_13 = arith.constant 0 : index
    %15 = vector.load %arg4[%c0_12, %c0_13] : memref<64x64xf32, #tpu.memory_space<vmem>>, vector<64x64xf32>
    %cst_14 = arith.constant dense<0.000000e+00> : vector<16x64xf32>
    %16 = tpu.matmul %14, %15, %cst_14 {dimension_numbers = #tpu.dot_dimension_numbers<[1], [0], [0], [1], [0, 0, 1, 1], [], []>} : vector<16x64xf32>, vector<64x64xf32>, vector<16x64xf32> -> vector<16x64xf32>
    %c0_15 = arith.constant 0 : index
    %c0_16 = arith.constant 0 : index
    %17 = vector.load %arg5[%c0_15, %c0_16] : memref<1x64xf32, #tpu.memory_space<vmem>>, vector<1x64xf32>
    %18 = vector.broadcast %17 : vector<1x64xf32> to vector<16x64xf32>
    %19 = arith.addf %16, %18 : vector<16x64xf32>
    %cst_17 = arith.constant 0.000000e+00 : f32
    %20 = vector.broadcast %cst_17 : f32 to vector<16x64xf32>
    %21 = arith.subf %20, %19 : vector<16x64xf32>
    %22 = math.exp %21 : vector<16x64xf32>
    %cst_18 = arith.constant 1.000000e+00 : f32
    %23 = vector.broadcast %cst_18 : f32 to vector<16x64xf32>
    %24 = arith.addf %23, %22 : vector<16x64xf32>
    %cst_19 = arith.constant 1.000000e+00 : f32
    %25 = vector.broadcast %cst_19 : f32 to vector<16x64xf32>
    %26 = arith.divf %25, %24 : vector<16x64xf32>
    %c0_20 = arith.constant 0 : index
    %c0_21 = arith.constant 0 : index
    %27 = vector.load %arg12[%c0_20, %c0_21] : memref<16x64xf32, #tpu.memory_space<vmem>>, vector<16x64xf32>
    tpu.vector_store %arg12[%c0_20, %c0_21], %26 {strides = array<i32>} : memref<16x64xf32, #tpu.memory_space<vmem>>, vector<16x64xf32>,
    %c0_22 = arith.constant 0 : index
    %c0_23 = arith.constant 0 : index
    %28 = vector.load %arg12[%c0_22, %c0_23] : memref<16x64xf32, #tpu.memory_space<vmem>>, vector<16x64xf32>
    %c0_24 = arith.constant 0 : index
    %c0_25 = arith.constant 0 : index
    %29 = vector.load %arg6[%c0_24, %c0_25] : memref<64x32xf32, #tpu.memory_space<vmem>>, vector<64x32xf32>
    %cst_26 = arith.constant dense<0.000000e+00> : vector<16x32xf32>
    %30 = tpu.matmul %28, %29, %cst_26 {dimension_numbers = #tpu.dot_dimension_numbers<[1], [0], [0], [1], [0, 0, 1, 1], [], []>} : vector<16x64xf32>, vector<64x32xf32>, vector<16x32xf32> -> vector<16x32xf32>
    %c0_27 = arith.constant 0 : index
    %c0_28 = arith.constant 0 : index
    %31 = vector.load %arg7[%c0_27, %c0_28] : memref<1x32xf32, #tpu.memory_space<vmem>>, vector<1x32xf32>
    %32 = vector.broadcast %31 : vector<1x32xf32> to vector<16x32xf32>
    %33 = arith.addf %30, %32 : vector<16x32xf32>
    %cst_29 = arith.constant 0.000000e+00 : f32
    %34 = vector.broadcast %cst_29 : f32 to vector<16x32xf32>
    %35 = arith.subf %34, %33 : vector<16x32xf32>
    %36 = math.exp %35 : vector<16x32xf32>
    %cst_30 = arith.constant 1.000000e+00 : f32
    %37 = vector.broadcast %cst_30 : f32 to vector<16x32xf32>
    %38 = arith.addf %37, %36 : vector<16x32xf32>
    %cst_31 = arith.constant 1.000000e+00 : f32
    %39 = vector.broadcast %cst_31 : f32 to vector<16x32xf32>
    %40 = arith.divf %39, %38 : vector<16x32xf32>
    %c0_32 = arith.constant 0 : index
    %c0_33 = arith.constant 0 : index
    %41 = vector.load %arg13[%c0_32, %c0_33] : memref<16x32xf32, #tpu.memory_space<vmem>>, vector<16x32xf32>
    tpu.vector_store %arg13[%c0_32, %c0_33], %40 {strides = array<i32>} : memref<16x32xf32, #tpu.memory_space<vmem>>, vector<16x32xf32>,
    %c0_34 = arith.constant 0 : index
    %c0_35 = arith.constant 0 : index
    %42 = vector.load %arg13[%c0_34, %c0_35] : memref<16x32xf32, #tpu.memory_space<vmem>>, vector<16x32xf32>
    %c0_36 = arith.constant 0 : index
    %c0_37 = arith.constant 0 : index
    %43 = vector.load %arg8[%c0_36, %c0_37] : memref<32x128xf32, #tpu.memory_space<vmem>>, vector<32x128xf32>
    %cst_38 = arith.constant dense<0.000000e+00> : vector<16x128xf32>
    %44 = tpu.matmul %42, %43, %cst_38 {dimension_numbers = #tpu.dot_dimension_numbers<[1], [0], [0], [1], [0, 0, 1, 1], [], []>} : vector<16x32xf32>, vector<32x128xf32>, vector<16x128xf32> -> vector<16x128xf32>
    %c0_39 = arith.constant 0 : index
    %c0_40 = arith.constant 0 : index
    %45 = vector.load %arg9[%c0_39, %c0_40] : memref<1x128xf32, #tpu.memory_space<vmem>>, vector<1x128xf32>
    %46 = vector.broadcast %45 : vector<1x128xf32> to vector<16x128xf32>
    %47 = arith.addf %44, %46 : vector<16x128xf32>
    %cst_41 = arith.constant 0.000000e+00 : f32
    %48 = vector.broadcast %cst_41 : f32 to vector<16x128xf32>
    %49 = arith.subf %48, %47 : vector<16x128xf32>
    %50 = math.exp %49 : vector<16x128xf32>
    %cst_42 = arith.constant 1.000000e+00 : f32
    %51 = vector.broadcast %cst_42 : f32 to vector<16x128xf32>
    %52 = arith.addf %51, %50 : vector<16x128xf32>
    %cst_43 = arith.constant 1.000000e+00 : f32
    %53 = vector.broadcast %cst_43 : f32 to vector<16x128xf32>
    %54 = arith.divf %53, %52 : vector<16x128xf32>
    %c0_44 = arith.constant 0 : index
    %c0_45 = arith.constant 0 : index
    %55 = vector.load %arg10[%c0_44, %c0_45] : memref<16x128xf32, #tpu.memory_space<vmem>>, vector<16x128xf32>
    tpu.vector_store %arg10[%c0_44, %c0_45], %54 {strides = array<i32>} : memref<16x128xf32, #tpu.memory_space<vmem>>, vector<16x128xf32>,
    return
  }
  func.func @transform_0(%arg0: i32) -> (i32, i32) {
    %c0_i32 = arith.constant 0 : i32
    %c0_i32_0 = arith.constant 0 : i32
    return %arg0, %c0_i32 : i32, i32
  }
  func.func @transform_1(%arg0: i32) -> (i32, i32) {
    %c0_i32 = arith.constant 0 : i32
    %c0_i32_0 = arith.constant 0 : i32
    %c0_i32_1 = arith.constant 0 : i32
    return %c0_i32, %c0_i32_0 : i32, i32
  }
  func.func @transform_2(%arg0: i32) -> (i32, i32) {
    %c0_i32 = arith.constant 0 : i32
    %c0_i32_0 = arith.constant 0 : i32
    %c0_i32_1 = arith.constant 0 : i32
    return %c0_i32, %c0_i32_0 : i32, i32
  }
  func.func @transform_3(%arg0: i32) -> (i32, i32) {
    %c0_i32 = arith.constant 0 : i32
    %c0_i32_0 = arith.constant 0 : i32
    %c0_i32_1 = arith.constant 0 : i32
    return %c0_i32, %c0_i32_0 : i32, i32
  }
  func.func @transform_4(%arg0: i32) -> (i32, i32) {
    %c0_i32 = arith.constant 0 : i32
    %c0_i32_0 = arith.constant 0 : i32
    %c0_i32_1 = arith.constant 0 : i32
    return %c0_i32, %c0_i32_0 : i32, i32
  }
  func.func @transform_5(%arg0: i32) -> (i32, i32) {
    %c0_i32 = arith.constant 0 : i32
    %c0_i32_0 = arith.constant 0 : i32
    %c0_i32_1 = arith.constant 0 : i32
    return %c0_i32, %c0_i32_0 : i32, i32
  }
  func.func @transform_6(%arg0: i32) -> (i32, i32) {
    %c0_i32 = arith.constant 0 : i32
    %c0_i32_0 = arith.constant 0 : i32
    %c0_i32_1 = arith.constant 0 : i32
    return %c0_i32, %c0_i32_0 : i32, i32
  }
  func.func @transform_7(%arg0: i32) -> (i32, i32) {
    %c0_i32 = arith.constant 0 : i32
    %c0_i32_0 = arith.constant 0 : i32
    %c0_i32_1 = arith.constant 0 : i32
    return %c0_i32, %c0_i32_0 : i32, i32
  }
  func.func @transform_8(%arg0: i32) -> (i32, i32) {
    %c0_i32 = arith.constant 0 : i32
    %c0_i32_0 = arith.constant 0 : i32
    %c0_i32_1 = arith.constant 0 : i32
    return %c0_i32, %c0_i32_0 : i32, i32
  }
  func.func @transform_9(%arg0: i32) -> (i32, i32) {
    %c0_i32 = arith.constant 0 : i32
    %c0_i32_0 = arith.constant 0 : i32
    return %arg0, %c0_i32 : i32, i32
  }
}

</mosaic_0001>

<llo_original>
// kernel: tpu_custom_call.1
$region0: #{tpu_custom_call.1}
  #allocation0 [shape = 'u32[]', space=smem, size = 0x4, offset = 0x4, fixed_abs, tag = 'smem constant byte address 0x4 - core index']
  #allocation1 [shape = 'u32[144,128]{1,0:T(1,128)}', space=vmem, size = 0x12000, scoped, tag = 'internal scratch']
  #allocation2 [shape = 'f32[16,64]{1,0:T(8,128)}', space=vmem, size = 0x2000, scoped, tag = 'scratch operand']
  #allocation3 [shape = 'f32[16,64]{1,0:T(8,128)}', space=vmem, size = 0x2000, scoped, tag = 'scratch operand']
  #allocation4 [shape = 'f32[16,32]{1,0:T(8,128)}', space=vmem, size = 0x2000, scoped, tag = 'scratch operand']
  %s0 = inlined_call_operand.vmem [shape: f32[64,16], index: 0, kind: input, shape index: {}]
  %s1 = inlined_call_operand.vmem [shape: f32[16,64], index: 1, kind: input, shape index: {}]
  %s2 = inlined_call_operand.vmem [shape: f32[1,64], index: 2, kind: input, shape index: {}]
  %s3 = inlined_call_operand.vmem [shape: f32[64,64], index: 3, kind: input, shape index: {}]
  %s4 = inlined_call_operand.vmem [shape: f32[1,64], index: 4, kind: input, shape index: {}]
  %s5 = inlined_call_operand.vmem [shape: f32[64,32], index: 5, kind: input, shape index: {}]
  %s6 = inlined_call_operand.vmem [shape: f32[1,32], index: 6, kind: input, shape index: {}]
  %s7 = inlined_call_operand.vmem [shape: f32[32,128], index: 7, kind: input, shape index: {}]
  %s8 = inlined_call_operand.vmem [shape: f32[1,128], index: 8, kind: input, shape index: {}]
  %s9 = inlined_call_operand.hbm [shape: f32[64,128], index: 9, kind: output, shape index: {}]
  %s10 = sld [smem:[#allocation0]]
  $region69: #{tpu_custom_call.1} parent=0
    _
  %s12 = ssub.s32 1, %s10
  %s13 = scalar_select 0, %s12, %s10
  $region1: #{tpu_custom_call.1} parent=0
    #allocation5 [shape = 'u8[16384]{0}', space=vmem, size = 0x4000, scoped, tag = 'output window, operand 0']
    #allocation6 [shape = 's32[2]{0}', space=sflag, size = 0x8, scoped, tag = 'scoped memory for tpu_custom_call.1']
    %14 = vsyncpa [#allocation6], 0
    %s15 = scalar_lea.sflag [#allocation6], 1
    %16 = vsyncpa %s15, 0
    loop: start=0, step=1, limit=6
    $region2: #{tpu_custom_call.1} parent=1 // loop_pre_header
      _
    $region3: #{tpu_custom_call.1} parent=1 // loop_header
      %s18 = sphi 0, %s22
      %p19 = scmp.ge.s32.totalorder %s18, 6
      %s28 = sphi 0, %s30
      %s31 = sphi 0, %s28
      %s32 = sphi 0, %s31
      %s48 = sphi 0, %s32
      %s52 = sphi 0, %s52
      %s54 = sphi 0, %s52
      %s55 = sphi 0, %s54
      %s69 = sphi 0, %s55
      %s73 = sphi 0, %s73
      %s75 = sphi 0, %s73
      %s76 = sphi 0, %s75
      %s90 = sphi 0, %s76
      %s94 = sphi 0, %s94
      %s96 = sphi 0, %s94
      %s97 = sphi 0, %s96
      %s111 = sphi 0, %s97
      %s115 = sphi 0, %s115
      %s117 = sphi 0, %s115
      %s118 = sphi 0, %s117
      %s132 = sphi 0, %s118
      %s136 = sphi 0, %s136
      %s138 = sphi 0, %s136
      %s139 = sphi 0, %s138
      %s153 = sphi 0, %s139
      %s157 = sphi 0, %s157
      %s159 = sphi 0, %s157
      %s160 = sphi 0, %s159
      %s174 = sphi 0, %s160
      %s178 = sphi 0, %s178
      %s180 = sphi 0, %s178
      %s181 = sphi 0, %s180
      %s195 = sphi 0, %s181
      %s199 = sphi 0, %s199
      %s201 = sphi 0, %s199
      %s202 = sphi 0, %s201
      %s216 = sphi 0, %s202
      %s222 = sphi 0, %s224
      %s225 = sphi 0, %s222
      %s226 = sphi 0, %s225
      %s242 = sphi 0, %s226
    $region4: #{tpu_custom_call.1} parent=1 // loop_header_branch
      %21 = sbr.rel (%p19) target = $region8
    $region5: #{tpu_custom_call.1} parent=1 // loop_body
      %s23 = ssub.s32 %s18, 1
      %s24 = ssub.s32 %s18, 2
      %s25 = sadd.s32 %s18, 1
      %s26 = ssub.s32 %s18, %s25
      %p27 = scmp.eq.s32.totalorder %s26, 0
      %s29 = sadd.s32 %s28, 1
      %s30 = scalar_select %p27, %s28, %s29
      %p33 = pneg %p27
      %p34 = scmp.eq.s32.totalorder %s18, 3
      %p35 = por %p33, %p34
      %p36 = scmp.ne.s32.totalorder %s28, %s31
      %p37 = scmp.eq.s32.totalorder %s18, 0
      %p38 = por %p36, %p37
      %p39 = scmp.ne.s32.totalorder %s28, %s31
      %p40 = scmp.eq.s32.totalorder %s23, 3
      %p41 = por %p39, %p40
      %p42 = scmp.ne.s32.totalorder %s31, %s32
      %p43 = scmp.eq.s32.totalorder %s23, 0
      %p44 = por %p42, %p43
      %p45 = scmp.ne.s32.totalorder %s31, %s32
      %p46 = scmp.eq.s32.totalorder %s24, 3
      %p47 = por %p45, %p46
      %p49 = scmp.ne.s32.totalorder %s32, %s48
      %p50 = scmp.eq.s32.totalorder %s24, 0
      %p51 = por %p49, %p50
      %s53 = sadd.s32 %s52, 1
      %p56 = scmp.eq.s32.totalorder %s18, 3
      %p57 = scmp.ne.s32.totalorder %s52, %s54
      %p58 = scmp.eq.s32.totalorder %s18, 0
      %p59 = por %p57, %p58
      %p60 = scmp.ne.s32.totalorder %s52, %s54
      %p61 = scmp.eq.s32.totalorder %s23, 3
      %p62 = por %p60, %p61
      %p63 = scmp.ne.s32.totalorder %s54, %s55
      %p64 = scmp.eq.s32.totalorder %s23, 0
      %p65 = por %p63, %p64
      %p66 = scmp.ne.s32.totalorder %s54, %s55
      %p67 = scmp.eq.s32.totalorder %s24, 3
      %p68 = por %p66, %p67
      %p70 = scmp.ne.s32.totalorder %s55, %s69
      %p71 = scmp.eq.s32.totalorder %s24, 0
      %p72 = por %p70, %p71
      %s74 = sadd.s32 %s73, 1
      %p77 = scmp.eq.s32.totalorder %s18, 3
      %p78 = scmp.ne.s32.totalorder %s73, %s75
      %p79 = scmp.eq.s32.totalorder %s18, 0
      %p80 = por %p78, %p79
      %p81 = scmp.ne.s32.totalorder %s73, %s75
      %p82 = scmp.eq.s32.totalorder %s23, 3
      %p83 = por %p81, %p82
      %p84 = scmp.ne.s32.totalorder %s75, %s76
      %p85 = scmp.eq.s32.totalorder %s23, 0
      %p86 = por %p84, %p85
      %p87 = scmp.ne.s32.totalorder %s75, %s76
      %p88 = scmp.eq.s32.totalorder %s24, 3
      %p89 = por %p87, %p88
      %p91 = scmp.ne.s32.totalorder %s76, %s90
      %p92 = scmp.eq.s32.totalorder %s24, 0
      %p93 = por %p91, %p92
      %s95 = sadd.s32 %s94, 1
      %p98 = scmp.eq.s32.totalorder %s18, 3
      %p99 = scmp.ne.s32.totalorder %s94, %s96
      %p100 = scmp.eq.s32.totalorder %s18, 0
      %p101 = por %p99, %p100
      %p102 = scmp.ne.s32.totalorder %s94, %s96
      %p103 = scmp.eq.s32.totalorder %s23, 3
      %p104 = por %p102, %p103
      %p105 = scmp.ne.s32.totalorder %s96, %s97
      %p106 = scmp.eq.s32.totalorder %s23, 0
      %p107 = por %p105, %p106
      %p108 = scmp.ne.s32.totalorder %s96, %s97
      %p109 = scmp.eq.s32.totalorder %s24, 3
      %p110 = por %p108, %p109
      %p112 = scmp.ne.s32.totalorder %s97, %s111
      %p113 = scmp.eq.s32.totalorder %s24, 0
      %p114 = por %p112, %p113
      %s116 = sadd.s32 %s115, 1
      %p119 = scmp.eq.s32.totalorder %s18, 3
      %p120 = scmp.ne.s32.totalorder %s115, %s117
      %p121 = scmp.eq.s32.totalorder %s18, 0
      %p122 = por %p120, %p121
      %p123 = scmp.ne.s32.totalorder %s115, %s117
      %p124 = scmp.eq.s32.totalorder %s23, 3
      %p125 = por %p123, %p124
      %p126 = scmp.ne.s32.totalorder %s117, %s118
      %p127 = scmp.eq.s32.totalorder %s23, 0
      %p128 = por %p126, %p127
      %p129 = scmp.ne.s32.totalorder %s117, %s118
      %p130 = scmp.eq.s32.totalorder %s24, 3
      %p131 = por %p129, %p130
      %p133 = scmp.ne.s32.totalorder %s118, %s132
      %p134 = scmp.eq.s32.totalorder %s24, 0
      %p135 = por %p133, %p134
      %s137 = sadd.s32 %s136, 1
      %p140 = scmp.eq.s32.totalorder %s18, 3
      %p141 = scmp.ne.s32.totalorder %s136, %s138
      %p142 = scmp.eq.s32.totalorder %s18, 0
      %p143 = por %p141, %p142
      %p144 = scmp.ne.s32.totalorder %s136, %s138
      %p145 = scmp.eq.s32.totalorder %s23, 3
      %p146 = por %p144, %p145
      %p147 = scmp.ne.s32.totalorder %s138, %s139
      %p148 = scmp.eq.s32.totalorder %s23, 0
      %p149 = por %p147, %p148
      %p150 = scmp.ne.s32.totalorder %s138, %s139
      %p151 = scmp.eq.s32.totalorder %s24, 3
      %p152 = por %p150, %p151
      %p154 = scmp.ne.s32.totalorder %s139, %s153
      %p155 = scmp.eq.s32.totalorder %s24, 0
      %p156 = por %p154, %p155
      %s158 = sadd.s32 %s157, 1
      %p161 = scmp.eq.s32.totalorder %s18, 3
      %p162 = scmp.ne.s32.totalorder %s157, %s159
      %p163 = scmp.eq.s32.totalorder %s18, 0
      %p164 = por %p162, %p163
      %p165 = scmp.ne.s32.totalorder %s157, %s159
      %p166 = scmp.eq.s32.totalorder %s23, 3
      %p167 = por %p165, %p166
      %p168 = scmp.ne.s32.totalorder %s159, %s160
      %p169 = scmp.eq.s32.totalorder %s23, 0
      %p170 = por %p168, %p169
      %p171 = scmp.ne.s32.totalorder %s159, %s160
      %p172 = scmp.eq.s32.totalorder %s24, 3
      %p173 = por %p171, %p172
      %p175 = scmp.ne.s32.totalorder %s160, %s174
      %p176 = scmp.eq.s32.totalorder %s24, 0
      %p177 = por %p175, %p176
      %s179 = sadd.s32 %s178, 1
      %p182 = scmp.eq.s32.totalorder %s18, 3
      %p183 = scmp.ne.s32.totalorder %s178, %s180
      %p184 = scmp.eq.s32.totalorder %s18, 0
      %p185 = por %p183, %p184
      %p186 = scmp.ne.s32.totalorder %s178, %s180
      %p187 = scmp.eq.s32.totalorder %s23, 3
      %p188 = por %p186, %p187
      %p189 = scmp.ne.s32.totalorder %s180, %s181
      %p190 = scmp.eq.s32.totalorder %s23, 0
      %p191 = por %p189, %p190
      %p192 = scmp.ne.s32.totalorder %s180, %s181
      %p193 = scmp.eq.s32.totalorder %s24, 3
      %p194 = por %p192, %p193
      %p196 = scmp.ne.s32.totalorder %s181, %s195
      %p197 = scmp.eq.s32.totalorder %s24, 0
      %p198 = por %p196, %p197
      %s200 = sadd.s32 %s199, 1
      %p203 = scmp.eq.s32.totalorder %s18, 3
      %p204 = scmp.ne.s32.totalorder %s199, %s201
      %p205 = scmp.eq.s32.totalorder %s18, 0
      %p206 = por %p204, %p205
      %p207 = scmp.ne.s32.totalorder %s199, %s201
      %p208 = scmp.eq.s32.totalorder %s23, 3
      %p209 = por %p207, %p208
      %p210 = scmp.ne.s32.totalorder %s201, %s202
      %p211 = scmp.eq.s32.totalorder %s23, 0
      %p212 = por %p210, %p211
      %p213 = scmp.ne.s32.totalorder %s201, %s202
      %p214 = scmp.eq.s32.totalorder %s24, 3
      %p215 = por %p213, %p214
      %p217 = scmp.ne.s32.totalorder %s202, %s216
      %p218 = scmp.eq.s32.totalorder %s24, 0
      %p219 = por %p217, %p218
      %s220 = ssub.s32 %s18, %s25
      %p221 = scmp.eq.s32.totalorder %s220, 0
      %s223 = sadd.s32 %s222, 1
      %s224 = scalar_select %p221, %s222, %s223
      %p227 = pneg %p221
      %p228 = scmp.eq.s32.totalorder %s18, 3
      %p229 = por %p227, %p228
      %p230 = scmp.ne.s32.totalorder %s222, %s225
      %p231 = scmp.eq.s32.totalorder %s18, 0
      %p232 = por %p230, %p231
      %p233 = scmp.ne.s32.totalorder %s222, %s225
      %p234 = scmp.eq.s32.totalorder %s23, 3
      %p235 = por %p233, %p234
      %p236 = scmp.ne.s32.totalorder %s225, %s226
      %p237 = scmp.eq.s32.totalorder %s23, 0
      %p238 = por %p236, %p237
      %p239 = scmp.ne.s32.totalorder %s225, %s226
      %p240 = scmp.eq.s32.totalorder %s24, 3
      %p241 = por %p239, %p240
      %p243 = scmp.ne.s32.totalorder %s226, %s242
      %p244 = scmp.eq.s32.totalorder %s24, 0
      %p245 = por %p243, %p244
      %p246 = scmp.le.s32.totalorder 1, %s18
      %p247 = scmp.lt.s32.totalorder %s18, 5
      %p248 = pnand %p246, %p247
      %p249 = pneg %p248
      // Predicated region
      $region9: #{tpu_custom_call.1} parent=5 // pred_check
        _
      $region10: #{tpu_custom_call.1} parent=5 // pred_check_branch
        %251 = sbr.rel (%p248) target = $region12
      $region11: #{tpu_custom_call.1} parent=5 // pred_region
        %s252 = ssub.s32 %s18, 1
        // Predicated region
        $region13: #{tpu_custom_call.1} parent=11 // pred_check
          %p253 = pneg %p65
        $region14: #{tpu_custom_call.1} parent=11 // pred_check_branch
          %255 = sbr.rel (%p253) target = $region16
        $region15: #{tpu_custom_call.1} parent=11 // pred_region
          _
        $region16: #{tpu_custom_call.1} parent=11 // pred_fallthru
          _
        // Predicated region
        $region17: #{tpu_custom_call.1} parent=11 // pred_check
          %p256 = pneg %p86
        $region18: #{tpu_custom_call.1} parent=11 // pred_check_branch
          %258 = sbr.rel (%p256) target = $region20
        $region19: #{tpu_custom_call.1} parent=11 // pred_region
          _
        $region20: #{tpu_custom_call.1} parent=11 // pred_fallthru
          _
        // Predicated region
        $region21: #{tpu_custom_call.1} parent=11 // pred_check
          %p259 = pneg %p107
        $region22: #{tpu_custom_call.1} parent=11 // pred_check_branch
          %261 = sbr.rel (%p259) target = $region24
        $region23: #{tpu_custom_call.1} parent=11 // pred_region
          _
        $region24: #{tpu_custom_call.1} parent=11 // pred_fallthru
          _
        // Predicated region
        $region25: #{tpu_custom_call.1} parent=11 // pred_check
          %p262 = pneg %p128
        $region26: #{tpu_custom_call.1} parent=11 // pred_check_branch
          %264 = sbr.rel (%p262) target = $region28
        $region27: #{tpu_custom_call.1} parent=11 // pred_region
          _
        $region28: #{tpu_custom_call.1} parent=11 // pred_fallthru
          _
        // Predicated region
        $region29: #{tpu_custom_call.1} parent=11 // pred_check
          %p265 = pneg %p149
        $region30: #{tpu_custom_call.1} parent=11 // pred_check_branch
          %267 = sbr.rel (%p265) target = $region32
        $region31: #{tpu_custom_call.1} parent=11 // pred_region
          _
        $region32: #{tpu_custom_call.1} parent=11 // pred_fallthru
          _
        // Predicated region
        $region33: #{tpu_custom_call.1} parent=11 // pred_check
          %p268 = pneg %p170
        $region34: #{tpu_custom_call.1} parent=11 // pred_check_branch
          %270 = sbr.rel (%p268) target = $region36
        $region35: #{tpu_custom_call.1} parent=11 // pred_region
          _
        $region36: #{tpu_custom_call.1} parent=11 // pred_fallthru
          _
        // Predicated region
        $region37: #{tpu_custom_call.1} parent=11 // pred_check
          %p271 = pneg %p191
        $region38: #{tpu_custom_call.1} parent=11 // pred_check_branch
          %273 = sbr.rel (%p271) target = $region40
        $region39: #{tpu_custom_call.1} parent=11 // pred_region
          _
        $region40: #{tpu_custom_call.1} parent=11 // pred_fallthru
          _
        // Predicated region
        $region41: #{tpu_custom_call.1} parent=11 // pred_check
          %p274 = pneg %p212
        $region42: #{tpu_custom_call.1} parent=11 // pred_check_branch
          %276 = sbr.rel (%p274) target = $region44
        $region43: #{tpu_custom_call.1} parent=11 // pred_region
          _
        $region44: #{tpu_custom_call.1} parent=11 // pred_fallthru
          _
      $region12: #{tpu_custom_call.1} parent=5 // pred_fallthru
        _
      %p277 = scmp.lt.s32.totalorder %s18, 4
      // Predicated region
      $region45: #{tpu_custom_call.1} parent=5 // pred_check
        %p278 = pneg %p277
      $region46: #{tpu_custom_call.1} parent=5 // pred_check_branch
        %280 = sbr.rel (%p278) target = $region48
      $region47: #{tpu_custom_call.1} parent=5 // pred_region
        // Predicated region
        $region49: #{tpu_custom_call.1} parent=47 // pred_check
          %p281 = pneg %p38
        $region50: #{tpu_custom_call.1} parent=47 // pred_check_branch
          %283 = sbr.rel (%p281) target = $region52
        $region51: #{tpu_custom_call.1} parent=47 // pred_region
          %s284 = smul.u32 2, %s18
          %p285 = scmp.lt.s32.totalorder %s284, 7
          %s286 = scalar_select %p285, %s284, 7
          %s287 = smul.addr %s286, 8
          %s288 = scalar_lea.vmem %s0, %s287
          %s289 = smul.u32 2, %s18
        $region52: #{tpu_custom_call.1} parent=47 // pred_fallthru
          _
      $region48: #{tpu_custom_call.1} parent=5 // pred_fallthru
        _
      %p290 = scmp.le.s32.totalorder 1, %s18
      %p291 = scmp.lt.s32.totalorder %s18, 5
      %p292 = pnand %p290, %p291
      %p293 = pneg %p292
      // Predicated region
      $region53: #{tpu_custom_call.1} parent=5 // pred_check
        _
      $region54: #{tpu_custom_call.1} parent=5 // pred_check_branch
        %295 = sbr.rel (%p292) target = $region56
      $region55: #{tpu_custom_call.1} parent=5 // pred_region
        %s296 = ssub.s32 %s18, 1
        %s297 = smul.u32 2, %s23
        %p298 = scmp.lt.s32.totalorder %s297, 7
        %s299 = scalar_select %p298, %s297, 7
        %s300 = smul.addr %s299, 8
        %s301 = scalar_lea.vmem %s0, %s300
        %p302 = pneg %p44
        %p303 = pneg %p41
        %p304 = pneg %p65
        %p305 = pneg %p62
        %p306 = pneg %p86
        %p307 = pneg %p83
        %p308 = pneg %p107
        %p309 = pneg %p104
        %p310 = pneg %p128
        %p311 = pneg %p125
        %p312 = pneg %p149
        %p313 = pneg %p146
        %p314 = pneg %p170
        %p315 = pneg %p167
        %p316 = pneg %p191
        %p317 = pneg %p188
        %p318 = pneg %p212
        %p319 = pneg %p209
        %p320 = pneg %p238
        %p321 = pneg %p235
        %s322 = sand.u32 %s225, 1
        %s323 = scalar_lea.sflag [#allocation6], %s322
        %s324 = sand.u32 %s225, 1
        %s325 = smul.addr %s324, 16
        %s326 = scalar_lea.vmem [#allocation5], %s325
        %s327 = smul.u32 2, %s23
        %p328 = scmp.lt.s32.totalorder %s327, 7
        %s329 = scalar_select %p328, %s327, 7
        %s330 = smul.addr %s329, 8
        %s331 = scalar_lea.vmem %s0, %s330
        %s332 = smul.u32 2, %s23
        %s333 = smul.u32 2, %s23
        %v334 = vld [vmem:[%s331] sm:$0xff]
        %v335 = vld [vmem:[%s331 + $0x8] sm:$0xff]
        %v336 = vld [vmem:[%s1] sm:$0xff]
        %v337 = vld [vmem:[%s1 + $0x8] sm:$0xff]
        %v338 = vld [vmem:[%s2] sm:$0x1]
        %v340 = vlaneseq
        %v341 = vshrl.u32 %v340, 7
        %v342 = vsub.s32 0, %v341
        %v343 = vrot.slane %v338, %v342
        %vm345 = vcmask 130048
        %v347 = vsel %vm345, %v334, 0
        %v350 = vsel %vm345, %v335, 0
        %352 = vmatprep.subr.mxu0 0.0
        %353 = vmatpush1.msra.mxu0 %v336
        %354 = vmatprep.subr.mxu0 0.0
        %355 = vmatpush1.msra.mxu0 %v337
        %356 = vmatprep.subr.mxu0 0.0
        %357 = vmatpush1.msra.mxu0 0.0
        %358 = vmatprep.subr.mxu0 0.0
        %359 = vmatpush1.msra.mxu0 0.0
        %360 = vmatprep.subr.mxu0 0.0
        %361 = vmatpush1.msra.mxu0 0.0
        %362 = vmatprep.subr.mxu0 0.0
        %363 = vmatpush1.msra.mxu0 0.0
        %364 = vmatprep.subr.mxu0 0.0
        %365 = vmatpush1.msra.mxu0 0.0
        %366 = vmatprep.subr.mxu0 0.0
        %367 = vmatpush1.msra.mxu0 0.0
        %368 = vmatprep.subr.mxu0 0.0
        %369 = vmatpush1.msra.mxu0 0.0
        %370 = vmatprep.subr.mxu0 0.0
        %371 = vmatpush1.msra.mxu0 0.0
        %372 = vmatprep.subr.mxu0 0.0
        %373 = vmatpush1.msra.mxu0 0.0
        %374 = vmatprep.subr.mxu0 0.0
        %375 = vmatpush1.msra.mxu0 0.0
        %376 = vmatprep.subr.mxu0 0.0
        %377 = vmatpush1.msra.mxu0 0.0
        %378 = vmatprep.subr.mxu0 0.0
        %379 = vmatpush1.msra.mxu0 0.0
        %380 = vmatprep.subr.mxu0 0.0
        %381 = vmatpush1.msra.mxu0 0.0
        %382 = vmatprep.subr.mxu0 0.0
        %383 = vmatpush1.msra.mxu0 0.0
        %384 = vmatprep.subr.mxu0 0.0
        %385 = vmatpush1.msra.mxu0 0.0
        %386 = vmatprep.subr.mxu0 0.0
        %387 = vmatpush1.msra.mxu0 0.0
        %388 = vmatprep.subr.mxu0 0.0
        %389 = vmatpush1.msra.mxu0 0.0
        %390 = vmatprep.subr.mxu0 0.0
        %391 = vmatpush1.msra.mxu0 0.0
        %392 = vmatprep.subr.mxu0 0.0
        %393 = vmatpush1.msra.mxu0 0.0
        %394 = vmatprep.subr.mxu0 0.0
        %395 = vmatpush1.msra.mxu0 0.0
        %396 = vmatprep.subr.mxu0 0.0
        %397 = vmatpush1.msra.mxu0 0.0
        %398 = vmatprep.subr.mxu0 0.0
        %399 = vmatpush1.msra.mxu0 0.0
        %400 = vmatprep.subr.mxu0 0.0
        %401 = vmatpush1.msra.mxu0 0.0
        %402 = vmatprep.subr.mxu0 0.0
        %403 = vmatpush1.msra.mxu0 0.0
        %404 = vmatprep.subr.mxu0 0.0
        %405 = vmatpush1.msra.mxu0 0.0
        %406 = vmatprep.subr.mxu0 0.0
        %407 = vmatpush1.msra.mxu0 0.0
        %408 = vmatprep.subr.mxu0 0.0
        %409 = vmatpush1.msra.mxu0 0.0
        %410 = vmatprep.subr.mxu0 0.0
        %411 = vmatpush1.msra.mxu0 0.0
        %412 = vmatprep.subr.mxu0 0.0
        %413 = vmatpush1.msra.mxu0 0.0
        %414 = vmatprep.subr.mxu0 0.0
        %415 = vmatpush1.msra.mxu0 0.0
        %416 = vmatprep.mubr.f32.mxu0 0.0
        %417 = vmatmul.mubr.f32.gmra.mrb[0].mxu0 %v347
        %v418 = vpop.f32.mrb[0].mxu0
        %v419 = vadd.f32 %v343, %v418
        %v420 = vpop.f32.mrb[0].mxu0
        %421 = vmatprep.mubr.f32.mxu0 0.0
        %422 = vmatmul.mubr.f32.gmra.mrb[0].mxu0 %v350
        %v423 = vpop.f32.mrb[0].mxu0
        %v424 = vadd.f32 %v343, %v423
        %v425 = vpop.f32.mrb[0].mxu0
        %426 = vdwg.mxu0
        %v427 = vsub.f32 0.0, %v419
        %v428 = vsub.f32 0.0, %v424
        %v429 = vmul.f32 %v427, 1.442695
        %v430 = vpow.pop %v429
        %v431 = vmul.f32 %v428, 1.442695
        %v432 = vpow.pop %v431
        %v433 = vadd.f32 %v430, 1.0
        %v434 = vadd.f32 %v432, 1.0
        %v435 = vrcp.pop %v433
        %v436 = vmul.f32 1.0, %v435
        %v437 = vrcp.pop %v434
        %v438 = vmul.f32 1.0, %v437
        %vm439 = vcmask 523264
        %440 = vst.msk [vmem:[#allocation2] sm:$0xff] %vm439, %v436
        %441 = vst.msk [vmem:[#allocation2 + $0x8] sm:$0xff] %vm439, %v438
        %v442 = vld [vmem:[#allocation2] sm:$0xff]
        %v443 = vld [vmem:[#allocation2 + $0x8] sm:$0xff]
        %v444 = vld [vmem:[%s3] sm:$0xff]
        %v445 = vld [vmem:[%s3 + $0x8] sm:$0xff]
        %v446 = vld [vmem:[%s3 + $0x10] sm:$0xff]
        %v447 = vld [vmem:[%s3 + $0x18] sm:$0xff]
        %v448 = vld [vmem:[%s3 + $0x20] sm:$0xff]
        %v449 = vld [vmem:[%s3 + $0x28] sm:$0xff]
        %v450 = vld [vmem:[%s3 + $0x30] sm:$0xff]
        %v451 = vld [vmem:[%s3 + $0x38] sm:$0xff]
        %v452 = vld [vmem:[%s4] sm:$0x1]
        %v454 = vlaneseq
        %v455 = vshrl.u32 %v454, 7
        %v456 = vsub.s32 0, %v455
        %v457 = vrot.slane %v452, %v456
        %v460 = vsel %vm439, %v442, 0
        %v463 = vsel %vm439, %v443, 0
        %465 = vmatprep.subr.mxu0 0.0
        %466 = vmatpush1.msra.mxu0 %v444
        %467 = vmatprep.subr.mxu0 0.0
        %468 = vmatpush1.msra.mxu0 %v445
        %469 = vmatprep.subr.mxu0 0.0
        %470 = vmatpush1.msra.mxu0 %v446
        %471 = vmatprep.subr.mxu0 0.0
        %472 = vmatpush1.msra.mxu0 %v447
        %473 = vmatprep.subr.mxu0 0.0
        %474 = vmatpush1.msra.mxu0 %v448
        %475 = vmatprep.subr.mxu0 0.0
        %476 = vmatpush1.msra.mxu0 %v449
        %477 = vmatprep.subr.mxu0 0.0
        %478 = vmatpush1.msra.mxu0 %v450
        %479 = vmatprep.subr.mxu0 0.0
        %480 = vmatpush1.msra.mxu0 %v451
        %481 = vmatprep.subr.mxu0 0.0
        %482 = vmatpush1.msra.mxu0 0.0
        %483 = vmatprep.subr.mxu0 0.0
        %484 = vmatpush1.msra.mxu0 0.0
        %485 = vmatprep.subr.mxu0 0.0
        %486 = vmatpush1.msra.mxu0 0.0
        %487 = vmatprep.subr.mxu0 0.0
        %488 = vmatpush1.msra.mxu0 0.0
        %489 = vmatprep.subr.mxu0 0.0
        %490 = vmatpush1.msra.mxu0 0.0
        %491 = vmatprep.subr.mxu0 0.0
        %492 = vmatpush1.msra.mxu0 0.0
        %493 = vmatprep.subr.mxu0 0.0
        %494 = vmatpush1.msra.mxu0 0.0
        %495 = vmatprep.subr.mxu0 0.0
        %496 = vmatpush1.msra.mxu0 0.0
        %497 = vmatprep.subr.mxu0 0.0
        %498 = vmatpush1.msra.mxu0 0.0
        %499 = vmatprep.subr.mxu0 0.0
        %500 = vmatpush1.msra.mxu0 0.0
        %501 = vmatprep.subr.mxu0 0.0
        %502 = vmatpush1.msra.mxu0 0.0
        %503 = vmatprep.subr.mxu0 0.0
        %504 = vmatpush1.msra.mxu0 0.0
        %505 = vmatprep.subr.mxu0 0.0
        %506 = vmatpush1.msra.mxu0 0.0
        %507 = vmatprep.subr.mxu0 0.0
        %508 = vmatpush1.msra.mxu0 0.0
        %509 = vmatprep.subr.mxu0 0.0
        %510 = vmatpush1.msra.mxu0 0.0
        %511 = vmatprep.subr.mxu0 0.0
        %512 = vmatpush1.msra.mxu0 0.0
        %513 = vmatprep.subr.mxu0 0.0
        %514 = vmatpush1.msra.mxu0 0.0
        %515 = vmatprep.subr.mxu0 0.0
        %516 = vmatpush1.msra.mxu0 0.0
        %517 = vmatprep.subr.mxu0 0.0
        %518 = vmatpush1.msra.mxu0 0.0
        %519 = vmatprep.subr.mxu0 0.0
        %520 = vmatpush1.msra.mxu0 0.0
        %521 = vmatprep.subr.mxu0 0.0
        %522 = vmatpush1.msra.mxu0 0.0
        %523 = vmatprep.subr.mxu0 0.0
        %524 = vmatpush1.msra.mxu0 0.0
        %525 = vmatprep.subr.mxu0 0.0
        %526 = vmatpush1.msra.mxu0 0.0
        %527 = vmatprep.subr.mxu0 0.0
        %528 = vmatpush1.msra.mxu0 0.0
        %529 = vmatprep.mubr.f32.mxu0 0.0
        %530 = vmatmul.mubr.f32.gmra.mrb[0].mxu0 %v460
        %v531 = vpop.f32.mrb[0].mxu0
        %v532 = vadd.f32 %v457, %v531
        %v533 = vpop.f32.mrb[0].mxu0
        %534 = vmatprep.mubr.f32.mxu0 0.0
        %535 = vmatmul.mubr.f32.gmra.mrb[0].mxu0 %v463
        %v536 = vpop.f32.mrb[0].mxu0
        %v537 = vadd.f32 %v457, %v536
        %v538 = vpop.f32.mrb[0].mxu0
        %539 = vdwg.mxu0
        %v540 = vsub.f32 0.0, %v532
        %v541 = vsub.f32 0.0, %v537
        %v542 = vmul.f32 %v540, 1.442695
        %v543 = vpow.pop %v542
        %v544 = vmul.f32 %v541, 1.442695
        %v545 = vpow.pop %v544
        %v546 = vadd.f32 %v543, 1.0
        %v547 = vadd.f32 %v545, 1.0
        %v548 = vrcp.pop %v546
        %v549 = vmul.f32 1.0, %v548
        %v550 = vrcp.pop %v547
        %v551 = vmul.f32 1.0, %v550
        %552 = vst.msk [vmem:[#allocation3] sm:$0xff] %vm439, %v549
        %553 = vst.msk [vmem:[#allocation3 + $0x8] sm:$0xff] %vm439, %v551
        %v554 = vld [vmem:[#allocation3] sm:$0xff]
        %v555 = vld [vmem:[#allocation3 + $0x8] sm:$0xff]
        %v556 = vld [vmem:[%s5] sm:$0xff]
        %v557 = vld [vmem:[%s5 + $0x8] sm:$0xff]
        %v558 = vld [vmem:[%s5 + $0x10] sm:$0xff]
        %v559 = vld [vmem:[%s5 + $0x18] sm:$0xff]
        %v560 = vld [vmem:[%s5 + $0x20] sm:$0xff]
        %v561 = vld [vmem:[%s5 + $0x28] sm:$0xff]
        %v562 = vld [vmem:[%s5 + $0x30] sm:$0xff]
        %v563 = vld [vmem:[%s5 + $0x38] sm:$0xff]
        %v564 = vld [vmem:[%s6] sm:$0x1]
        %v566 = vlaneseq
        %v567 = vshrl.u32 %v566, 7
        %v568 = vsub.s32 0, %v567
        %v569 = vrot.slane %v564, %v568
        %v572 = vsel %vm439, %v554, 0
        %v575 = vsel %vm439, %v555, 0
        %577 = vmatprep.subr.mxu0 0.0
        %578 = vmatpush1.msra.mxu0 %v556
        %579 = vmatprep.subr.mxu0 0.0
        %580 = vmatpush1.msra.mxu0 %v557
        %581 = vmatprep.subr.mxu0 0.0
        %582 = vmatpush1.msra.mxu0 %v558
        %583 = vmatprep.subr.mxu0 0.0
        %584 = vmatpush1.msra.mxu0 %v559
        %585 = vmatprep.subr.mxu0 0.0
        %586 = vmatpush1.msra.mxu0 %v560
        %587 = vmatprep.subr.mxu0 0.0
        %588 = vmatpush1.msra.mxu0 %v561
        %589 = vmatprep.subr.mxu0 0.0
        %590 = vmatpush1.msra.mxu0 %v562
        %591 = vmatprep.subr.mxu0 0.0
        %592 = vmatpush1.msra.mxu0 %v563
        %593 = vmatprep.subr.mxu0 0.0
        %594 = vmatpush1.msra.mxu0 0.0
        %595 = vmatprep.subr.mxu0 0.0
        %596 = vmatpush1.msra.mxu0 0.0
        %597 = vmatprep.subr.mxu0 0.0
        %598 = vmatpush1.msra.mxu0 0.0
        %599 = vmatprep.subr.mxu0 0.0
        %600 = vmatpush1.msra.mxu0 0.0
        %601 = vmatprep.subr.mxu0 0.0
        %602 = vmatpush1.msra.mxu0 0.0
        %603 = vmatprep.subr.mxu0 0.0
        %604 = vmatpush1.msra.mxu0 0.0
        %605 = vmatprep.subr.mxu0 0.0
        %606 = vmatpush1.msra.mxu0 0.0
        %607 = vmatprep.subr.mxu0 0.0
        %608 = vmatpush1.msra.mxu0 0.0
        %609 = vmatprep.subr.mxu0 0.0
        %610 = vmatpush1.msra.mxu0 0.0
        %611 = vmatprep.subr.mxu0 0.0
        %612 = vmatpush1.msra.mxu0 0.0
        %613 = vmatprep.subr.mxu0 0.0
        %614 = vmatpush1.msra.mxu0 0.0
        %615 = vmatprep.subr.mxu0 0.0
        %616 = vmatpush1.msra.mxu0 0.0
        %617 = vmatprep.subr.mxu0 0.0
        %618 = vmatpush1.msra.mxu0 0.0
        %619 = vmatprep.subr.mxu0 0.0
        %620 = vmatpush1.msra.mxu0 0.0
        %621 = vmatprep.subr.mxu0 0.0
        %622 = vmatpush1.msra.mxu0 0.0
        %623 = vmatprep.subr.mxu0 0.0
        %624 = vmatpush1.msra.mxu0 0.0
        %625 = vmatprep.subr.mxu0 0.0
        %626 = vmatpush1.msra.mxu0 0.0
        %627 = vmatprep.subr.mxu0 0.0
        %628 = vmatpush1.msra.mxu0 0.0
        %629 = vmatprep.subr.mxu0 0.0
        %630 = vmatpush1.msra.mxu0 0.0
        %631 = vmatprep.subr.mxu0 0.0
        %632 = vmatpush1.msra.mxu0 0.0
        %633 = vmatprep.subr.mxu0 0.0
        %634 = vmatpush1.msra.mxu0 0.0
        %635 = vmatprep.subr.mxu0 0.0
        %636 = vmatpush1.msra.mxu0 0.0
        %637 = vmatprep.subr.mxu0 0.0
        %638 = vmatpush1.msra.mxu0 0.0
        %639 = vmatprep.subr.mxu0 0.0
        %640 = vmatpush1.msra.mxu0 0.0
        %641 = vmatprep.mubr.f32.mxu0 0.0
        %642 = vmatmul.mubr.f32.gmra.mrb[0].mxu0 %v572
        %v643 = vpop.f32.mrb[0].mxu0
        %v644 = vadd.f32 %v569, %v643
        %v645 = vpop.f32.mrb[0].mxu0
        %646 = vmatprep.mubr.f32.mxu0 0.0
        %647 = vmatmul.mubr.f32.gmra.mrb[0].mxu0 %v575
        %v648 = vpop.f32.mrb[0].mxu0
        %v649 = vadd.f32 %v569, %v648
        %v650 = vpop.f32.mrb[0].mxu0
        %651 = vdwg.mxu0
        %v652 = vsub.f32 0.0, %v644
        %v653 = vsub.f32 0.0, %v649
        %v654 = vmul.f32 %v652, 1.442695
        %v655 = vpow.pop %v654
        %v656 = vmul.f32 %v653, 1.442695
        %v657 = vpow.pop %v656
        %v658 = vadd.f32 %v655, 1.0
        %v659 = vadd.f32 %v657, 1.0
        %v660 = vrcp.pop %v658
        %v661 = vmul.f32 1.0, %v660
        %v662 = vrcp.pop %v659
        %v663 = vmul.f32 1.0, %v662
        %vm664 = vcmask 261120
        %665 = vst.msk [vmem:[#allocation4] sm:$0xff] %vm664, %v661
        %666 = vst.msk [vmem:[#allocation4 + $0x8] sm:$0xff] %vm664, %v663
        %v667 = vld [vmem:[#allocation4] sm:$0xff]
        %v668 = vld [vmem:[#allocation4 + $0x8] sm:$0xff]
        %v669 = vld [vmem:[%s7] sm:$0xff]
        %v670 = vld [vmem:[%s7 + $0x8] sm:$0xff]
        %v671 = vld [vmem:[%s7 + $0x10] sm:$0xff]
        %v672 = vld [vmem:[%s7 + $0x18] sm:$0xff]
        %v673 = vld [vmem:[%s8] sm:$0x1]
        %v675 = vlaneseq
        %v676 = vshrl.u32 %v675, 7
        %v677 = vsub.s32 0, %v676
        %v678 = vrot.slane %v673, %v677
        %v681 = vsel %vm664, %v667, 0
        %v684 = vsel %vm664, %v668, 0
        %686 = vmatprep.subr.mxu0 0.0
        %687 = vmatpush1.msra.mxu0 %v669
        %688 = vmatprep.subr.mxu0 0.0
        %689 = vmatpush1.msra.mxu0 %v670
        %690 = vmatprep.subr.mxu0 0.0
        %691 = vmatpush1.msra.mxu0 %v671
        %692 = vmatprep.subr.mxu0 0.0
        %693 = vmatpush1.msra.mxu0 %v672
        %694 = vmatprep.subr.mxu0 0.0
        %695 = vmatpush1.msra.mxu0 0.0
        %696 = vmatprep.subr.mxu0 0.0
        %697 = vmatpush1.msra.mxu0 0.0
        %698 = vmatprep.subr.mxu0 0.0
        %699 = vmatpush1.msra.mxu0 0.0
        %700 = vmatprep.subr.mxu0 0.0
        %701 = vmatpush1.msra.mxu0 0.0
        %702 = vmatprep.subr.mxu0 0.0
        %703 = vmatpush1.msra.mxu0 0.0
        %704 = vmatprep.subr.mxu0 0.0
        %705 = vmatpush1.msra.mxu0 0.0
        %706 = vmatprep.subr.mxu0 0.0
        %707 = vmatpush1.msra.mxu0 0.0
        %708 = vmatprep.subr.mxu0 0.0
        %709 = vmatpush1.msra.mxu0 0.0
        %710 = vmatprep.subr.mxu0 0.0
        %711 = vmatpush1.msra.mxu0 0.0
        %712 = vmatprep.subr.mxu0 0.0
        %713 = vmatpush1.msra.mxu0 0.0
        %714 = vmatprep.subr.mxu0 0.0
        %715 = vmatpush1.msra.mxu0 0.0
        %716 = vmatprep.subr.mxu0 0.0
        %717 = vmatpush1.msra.mxu0 0.0
        %718 = vmatprep.subr.mxu0 0.0
        %719 = vmatpush1.msra.mxu0 0.0
        %720 = vmatprep.subr.mxu0 0.0
        %721 = vmatpush1.msra.mxu0 0.0
        %722 = vmatprep.subr.mxu0 0.0
        %723 = vmatpush1.msra.mxu0 0.0
        %724 = vmatprep.subr.mxu0 0.0
        %725 = vmatpush1.msra.mxu0 0.0
        %726 = vmatprep.subr.mxu0 0.0
        %727 = vmatpush1.msra.mxu0 0.0
        %728 = vmatprep.subr.mxu0 0.0
        %729 = vmatpush1.msra.mxu0 0.0
        %730 = vmatprep.subr.mxu0 0.0
        %731 = vmatpush1.msra.mxu0 0.0
        %732 = vmatprep.subr.mxu0 0.0
        %733 = vmatpush1.msra.mxu0 0.0
        %734 = vmatprep.subr.mxu0 0.0
        %735 = vmatpush1.msra.mxu0 0.0
        %736 = vmatprep.subr.mxu0 0.0
        %737 = vmatpush1.msra.mxu0 0.0
        %738 = vmatprep.subr.mxu0 0.0
        %739 = vmatpush1.msra.mxu0 0.0
        %740 = vmatprep.subr.mxu0 0.0
        %741 = vmatpush1.msra.mxu0 0.0
        %742 = vmatprep.subr.mxu0 0.0
        %743 = vmatpush1.msra.mxu0 0.0
        %744 = vmatprep.subr.mxu0 0.0
        %745 = vmatpush1.msra.mxu0 0.0
        %746 = vmatprep.subr.mxu0 0.0
        %747 = vmatpush1.msra.mxu0 0.0
        %748 = vmatprep.subr.mxu0 0.0
        %749 = vmatpush1.msra.mxu0 0.0
        %750 = vmatprep.mubr.f32.mxu0 0.0
        %751 = vmatmul.mubr.f32.gmra.mrb[0].mxu0 %v681
        %v752 = vpop.f32.mrb[0].mxu0
        %v753 = vadd.f32 %v678, %v752
        %v754 = vpop.f32.mrb[0].mxu0
        %755 = vmatprep.mubr.f32.mxu0 0.0
        %756 = vmatmul.mubr.f32.gmra.mrb[0].mxu0 %v684
        %v757 = vpop.f32.mrb[0].mxu0
        %v758 = vadd.f32 %v678, %v757
        %v759 = vpop.f32.mrb[0].mxu0
        %760 = vdwg.mxu0
        %v761 = vsub.f32 0.0, %v753
        %v762 = vsub.f32 0.0, %v758
        %v763 = vmul.f32 %v761, 1.442695
        %v764 = vpow.pop %v763
        %v765 = vmul.f32 %v762, 1.442695
        %v766 = vpow.pop %v765
        %v767 = vadd.f32 %v764, 1.0
        %v768 = vadd.f32 %v766, 1.0
        %v769 = vrcp.pop %v767
        %v770 = vmul.f32 1.0, %v769
        %v771 = vrcp.pop %v768
        %v772 = vmul.f32 1.0, %v771
        %773 = vst [vmem:[%s326] sm:$0xff] %v770
        %774 = vst [vmem:[%s326 + $0x8] sm:$0xff] %v772
        %s775 = sand.u32 %s225, 1
        %s776 = scalar_lea.sflag [#allocation6], %s775
        %s777 = sand.u32 %s225, 1
        %s778 = smul.addr %s777, 16
        %s779 = scalar_lea.vmem [#allocation5], %s778
        // Predicated region
        $region57: #{tpu_custom_call.1} parent=55 // pred_check
          %p780 = pneg %p235
        $region58: #{tpu_custom_call.1} parent=55 // pred_check_branch
          %782 = sbr.rel (%p780) target = $region60
        $region59: #{tpu_custom_call.1} parent=55 // pred_region
          %s783 = smul.u32 2, %s23
          %s785 = ssub.s32 256, 256
          %786 = vsyncadd %s776, %s785
          %s787 = smul.addr %s783, 128
          %s788 = scalar_lea.hbm %s9, %s787
          %s789 = sshll.u32 %s779, 4
          %s790 = int_to_ptr.vmem [resolvable:$true] %s789
          %795 = dma.vmem_to_hbm [thread:$0]  %s790, 256, %s788, %s776, 128, 128, 8
        $region60: #{tpu_custom_call.1} parent=55 // pred_fallthru
          _
      $region56: #{tpu_custom_call.1} parent=5 // pred_fallthru
        _
      %p796 = scmp.le.s32.totalorder 2, %s18
      // Predicated region
      $region61: #{tpu_custom_call.1} parent=5 // pred_check
        %p797 = pneg %p796
      $region62: #{tpu_custom_call.1} parent=5 // pred_check_branch
        %799 = sbr.rel (%p797) target = $region64
      $region63: #{tpu_custom_call.1} parent=5 // pred_region
        %s800 = ssub.s32 %s18, 2
        // Predicated region
        $region65: #{tpu_custom_call.1} parent=63 // pred_check
          %p801 = pneg %p241
        $region66: #{tpu_custom_call.1} parent=63 // pred_check_branch
          %803 = sbr.rel (%p801) target = $region68
        $region67: #{tpu_custom_call.1} parent=63 // pred_region
          %s804 = sand.u32 %s226, 1
          %s805 = scalar_lea.sflag [#allocation6], %s804
          %s806 = sand.u32 %s226, 1
          %s807 = smul.addr %s806, 16
          %s808 = scalar_lea.vmem [#allocation5], %s807
          %809 = dma.done %s805, 256
        $region68: #{tpu_custom_call.1} parent=63 // pred_fallthru
          _
      $region64: #{tpu_custom_call.1} parent=5 // pred_fallthru
        _
    $region6: #{tpu_custom_call.1} parent=1 // loop_footer
      %s22 = sadd.s32 1, %s18
    $region7: #{tpu_custom_call.1} parent=1 // loop_footer_branch
      %17 = sbr.rel target = $region3
    $region8: #{tpu_custom_call.1} parent=1 // loop_exit
      _
    %810 = vsyncpa [#allocation6], 1
    %s811 = scalar_lea.sflag [#allocation6], 1
    %812 = vsyncpa %s811, 1

</llo_original>
